<compile_context>
chip_gen: v6e
topology: v6e:2x2x1
jax: 0.10.0
libtpu: 0.0.40
codegen_flags: <defaults>
</compile_context>

<pallas_src>
import functools

import numpy as np
import jax
import jax.numpy as jnp
from jax.experimental import pallas as pl
from jax.experimental.pallas import tpu as pltpu


def _round_up(x, m):
    return ((x + m - 1) // m) * m


# ----------------------------------------------------------------------------
# Pallas kernel (transposed layout):
#   logits_T = W_T @ x_T + b ; per-pair max value ; per-pair argmax label
# ----------------------------------------------------------------------------
def _dir_link_kernel(xT_ref, w_ref, b_ref, logitsT_ref, maxv_ref, label_ref,
                     *, out_real):
    xT = xT_ref[...]                                  # (D, TN)     bf16
    w = w_ref[...]                                    # (O_pad, D)  bf16
    b = b_ref[...]                                    # (O_pad, 1)  f32 (-inf on padded rows)

    # bf16 MXU matmul with f32 accumulation; logits kept f32.
    logits = jnp.dot(w, xT, preferred_element_type=jnp.float32) + b  # (O_pad, TN)
    logitsT_ref[...] = logits

    # torch.max(logits, dim=-1): value + first maximal index.
    # Reduction runs over sublanes -> (1, TN) outputs are lane-dense.
    maxv = jnp.max(logits, axis=0, keepdims=True)     # (1, TN)
    maxv_ref[...] = maxv

    o_pad = logits.shape[0]
    ids = jax.lax.broadcasted_iota(jnp.int32, logits.shape, 0)
    cand = jnp.where(logits == maxv, ids, o_pad)      # non-max rows -> sentinel
    label = jnp.min(cand, axis=0, keepdims=True)      # first maximal index
    # Guard: NaN rows / fully padded columns would leave the sentinel; clamp
    # into the real class range so downstream glue never sees OOB labels.
    label = jnp.where(label >= out_real, 0, label)
    label_ref[...] = label.astype(jnp.int32)


@functools.partial(jax.jit, static_argnames=("tile_n",))
def dir_link_labeler_pallas(x, w, b, *, tile_n=1024):
    """x: (N, D) f32, w: (D, O) f32, b: (1, O) f32.

    Returns (logits (N, O) f32, max_val (N,) f32, argmax_label (N,) int32)."""
    N, D = x.shape
    O = w.shape[1]

    O_pad = max(8, _round_up(O, 8))
    TN = min(tile_n, _round_up(max(N, 1), 128))
    N_pad = _round_up(N, TN)
    grid_n = pl.cdiv(N_pad, TN)

    # Transposed / padded / bf16 operands (fused into the same XLA program).
    xT = jnp.zeros((D, N_pad), jnp.bfloat16).at[:, :N].set(
        x.T.astype(jnp.bfloat16))
    wT = jnp.zeros((O_pad, D), jnp.bfloat16).at[:O, :].set(
        w.T.astype(jnp.bfloat16))
    bP = jnp.full((O_pad, 1), -jnp.inf, jnp.float32).at[:O, :].set(
        b.reshape(O, 1).astype(jnp.float32))

    kernel = functools.partial(_dir_link_kernel, out_real=O)

    logitsT, maxv, label = pl.pallas_call(
        kernel,
        out_shape=(
            jax.ShapeDtypeStruct((O_pad, N_pad), jnp.float32),
            jax.ShapeDtypeStruct((1, N_pad), jnp.float32),
            jax.ShapeDtypeStruct((1, N_pad), jnp.int32),
        ),
        grid=(grid_n,),
        in_specs=[
            pl.BlockSpec((D, TN), lambda i: (0, i)),       # x tiles stream over N
            pl.BlockSpec((O_pad, D), lambda i: (0, 0)),    # W resident across grid
            pl.BlockSpec((O_pad, 1), lambda i: (0, 0)),    # bias resident across grid
        ],
        out_specs=(
            pl.BlockSpec((O_pad, TN), lambda i: (0, i)),   # dense logits slab
            pl.BlockSpec((1, TN), lambda i: (0, i)),       # lane-dense max values
            pl.BlockSpec((1, TN), lambda i: (0, i)),       # lane-dense argmax labels
        ),
        compiler_params=pltpu.CompilerParams(
            dimension_semantics=("parallel",),             # megacore-shard N on v7x
            vmem_limit_bytes=32 * 1024 * 1024,
        ),
    )(xT, wT, bP)

    logits = logitsT[:O, :N].T      # back to (N, O) for the module contract
    max_val = maxv[0, :N]
    argmax_label = label[0, :N]
    return logits, max_val, argmax_label


# ----------------------------------------------------------------------------
# Host-side reproduction of DirLinkLabeler.__get_preds (pandas -> numpy).
# TODO(synk): pandas-style dynamic-shape groupby/filter/sort has no fixed-shape
# Pallas equivalent; it stays as host-side NumPy glue.
# ----------------------------------------------------------------------------
def _get_preds_np(max_val, argmax_label, pair_p1, pair_p2, sample_id,
                  link_labels_wo_root, rev_label_threshold):
    v = np.asarray(max_val, dtype=np.float32).reshape(-1)
    lab = np.asarray(argmax_label, dtype=np.int64).reshape(-1)
    p1_orig = np.asarray(pair_p1, dtype=np.int64)
    p2_orig = np.asarray(pair_p2, dtype=np.int64)
    sample_id = np.asarray(sample_id, dtype=np.int64)

    # reverse pairs whose label is above the reverse-label threshold
    rev = lab > rev_label_threshold
    p1 = np.where(rev, p2_orig, p1_orig)
    p2 = np.where(rev, p1_orig, p2_orig)
    lab = lab.copy()
    lab[rev] -= link_labels_wo_root

    # keep rows that are either "no link" labeled or self references
    no_link = lab != 0
    self_refs = p1 == p2
    cond = np.logical_or(no_link, self_refs)
    lab[cond] = 1
    v_f, lab_f, p1_f, p2_f = v[cond], lab[cond], p1[cond], p2[cond]
    lab_f = lab_f - 1

    # sort by value descending, then groupby('p1').first()
    order = np.argsort(-v_f, kind="stable")
    lab_s, p1_s, p2_s = lab_f[order], p1_f[order], p2_f[order]
    _, first_idx = np.unique(p1_s, return_index=True)   # unique p1 sorted ascending
    seg_label = lab_s[first_idx]
    seg_p2 = p2_s[first_idx]

    # per-sample number of unique segments (sample order of appearance)
    samples, sample_first = np.unique(sample_id, return_index=True)
    ordered_samples = samples[np.argsort(sample_first)]
    lengths_segs = np.array(
        [len(np.unique(p1_orig[sample_id == s])) for s in ordered_samples],
        dtype=np.int64,
    )
    g_seg_starts = np.concatenate([[0], np.cumsum(lengths_segs)[:-1]])
    offsets = np.repeat(g_seg_starts, lengths_segs)

    links = seg_p2 - offsets
    return seg_label, links


# ----------------------------------------------------------------------------
# Module wrapper (deterministic synthetic parameters).
# ----------------------------------------------------------------------------
class DirLinkLabelerPallas:
    def __init__(self, input_size, output_size, key):
        self.link_labels_wo_root = output_size - 1
        self.rev_label_threshold = output_size
        clf_out = (output_size - 1) * 2 + 2
        kw, kb = jax.random.split(key)
        # nn.Linear(input_size, clf_out) -> weight (clf_out, input_size); store transposed.
        self.w = (jax.random.normal(kw, (input_size, clf_out), jnp.float32)
                  * (1.0 / np.sqrt(input_size)))
        self.b = jax.random.normal(kb, (1, clf_out), jnp.float32) * 0.01

    def forward(self, x, pair_p1, pair_p2, sample_id):
        logits, max_val, argmax_label = dir_link_labeler_pallas(x, self.w, self.b)
        link_labels, links = _get_preds_np(
            np.asarray(max_val), np.asarray(argmax_label),
            pair_p1, pair_p2, sample_id,
            self.link_labels_wo_root, self.rev_label_threshold,
        )
        return logits, link_labels, links


if __name__ == "__main__":
    key = jax.random.PRNGKey(0)
    k_x, k_params = jax.random.split(key)

    input_size = 32
    output_size = 3   # link labels incl. root -> clf output dim = (3-1)*2 + 2 = 6

    # Build all bi-directional pairs (incl. self pairs) for 2 samples with 3 and 2 segments.
    seg_counts = [3, 2]
    pair_p1, pair_p2, sample_id = [], [], []
    offset = 0
    for sid, n in enumerate(seg_counts):
        for i in range(n):
            for j in range(n):
                pair_p1.append(offset + i)
                pair_p2.append(offset + j)
                sample_id.append(sid)
        offset += n
    pair_p1 = np.asarray(pair_p1, dtype=np.int64)
    pair_p2 = np.asarray(pair_p2, dtype=np.int64)
    sample_id = np.asarray(sample_id, dtype=np.int64)
    num_pairs = pair_p1.shape[0]  # 13

    x = jax.random.normal(k_x, (num_pairs, input_size), jnp.float32)

    model = DirLinkLabelerPallas(input_size, output_size, k_params)
    logits, link_labels, links = model.forward(x, pair_p1, pair_p2, sample_id)
    jax.block_until_ready(logits)

    # Sanity checks.
    # 1) logits vs a plain-JAX bf16-operand reference (kernel matmuls in bf16).
    ref_logits = jnp.dot(x.astype(jnp.bfloat16), model.w.astype(jnp.bfloat16),
                         preferred_element_type=jnp.float32) + model.b
    assert np.allclose(np.asarray(logits), np.asarray(ref_logits),
                       atol=5e-3, rtol=5e-3), "logits mismatch"

    # 2) max / argmax consistent with the kernel's own logits (jit cache hit).
    _, max_val, argmax_label = dir_link_labeler_pallas(x, model.w, model.b)
    logits_np = np.asarray(logits)
    assert np.allclose(np.asarray(max_val), logits_np.max(axis=-1), atol=1e-6), "max mismatch"
    assert np.array_equal(np.asarray(argmax_label), logits_np.argmax(axis=-1)), "argmax mismatch"

    # 3) host-glue output shapes.
    assert link_labels.shape == links.shape
    assert link_labels.shape[0] == sum(seg_counts)

    print("KERNEL_OK")
</pallas_src>

<mosaic_0001>
module attributes {stable_mosaic.version = 11 : i64} {
  func.func @_dir_link_kernel(%arg0: i32, %arg1: memref<32x128xbf16, #tpu.memory_space<vmem>>, %arg2: memref<8x32xbf16, #tpu.memory_space<vmem>>, %arg3: memref<8x1xf32, #tpu.memory_space<vmem>>, %arg4: memref<8x128xf32, #tpu.memory_space<vmem>>, %arg5: memref<1x128xf32, #tpu.memory_space<vmem>>, %arg6: memref<1x128xi32, #tpu.memory_space<vmem>>) attributes {dimension_semantics = [#tpu.dimension_semantics<parallel>], iteration_bounds = array<i64: 1>, scalar_prefetch = 0 : i64, scratch_operands = 0 : i64, tpu.core_type = #tpu.core_type<tc>, window_params = [{transform_indices = @transform_0, window_bounds = array<i64: 32, 128>}, {pipeline_mode = #tpu.pipeline_mode<synchronous>, transform_indices = @transform_1, window_bounds = array<i64: 8, 32>}, {pipeline_mode = #tpu.pipeline_mode<synchronous>, transform_indices = @transform_2, window_bounds = array<i64: 8, 1>}, {transform_indices = @transform_3, window_bounds = array<i64: 8, 128>}, {transform_indices = @transform_4, window_bounds = array<i64: 1, 128>}, {transform_indices = @transform_5, window_bounds = array<i64: 1, 128>}]} {
    %c0 = arith.constant 0 : index
    %c0_0 = arith.constant 0 : index
    %0 = vector.load %arg1[%c0, %c0_0] : memref<32x128xbf16, #tpu.memory_space<vmem>>, vector<32x128xbf16>
    %c0_1 = arith.constant 0 : index
    %c0_2 = arith.constant 0 : index
    %1 = vector.load %arg2[%c0_1, %c0_2] : memref<8x32xbf16, #tpu.memory_space<vmem>>, vector<8x32xbf16>
    %c0_3 = arith.constant 0 : index
    %c0_4 = arith.constant 0 : index
    %2 = vector.load %arg3[%c0_3, %c0_4] : memref<8x1xf32, #tpu.memory_space<vmem>>, vector<8x1xf32>
    %cst = arith.constant dense<0.000000e+00> : vector<8x128xf32>
    %3 = tpu.matmul %1, %0, %cst {dimension_numbers = #tpu.dot_dimension_numbers<[1], [0], [0], [1], [0, 0, 1, 1], [], []>} : vector<8x32xbf16>, vector<32x128xbf16>, vector<8x128xf32> -> vector<8x128xf32>
    %4 = vector.broadcast %2 : vector<8x1xf32> to vector<8x128xf32>
    %5 = arith.addf %3, %4 : vector<8x128xf32>
    %c0_5 = arith.constant 0 : index
    %c0_6 = arith.constant 0 : index
    %6 = vector.load %arg4[%c0_5, %c0_6] : memref<8x128xf32, #tpu.memory_space<vmem>>, vector<8x128xf32>
    tpu.vector_store %arg4[%c0_5, %c0_6], %5 {strides = array<i32>} : memref<8x128xf32, #tpu.memory_space<vmem>>, vector<8x128xf32>,
    %cst_7 = arith.constant dense<0xFF800000> : vector<128xf32>
    %7 = vector.multi_reduction <maximumf>, %5, %cst_7 [0] : vector<8x128xf32> to vector<128xf32>
    %8 = vector.shape_cast %7 : vector<128xf32> to vector<1x128xf32>
    %c0_8 = arith.constant 0 : index
    %c0_9 = arith.constant 0 : index
    %9 = vector.load %arg5[%c0_8, %c0_9] : memref<1x128xf32, #tpu.memory_space<vmem>>, vector<1x128xf32>
    tpu.vector_store %arg5[%c0_8, %c0_9], %8 {strides = array<i32>} : memref<1x128xf32, #tpu.memory_space<vmem>>, vector<1x128xf32>,
    %10 = tpu.iota {dimensions = array<i32: 0>} : vector<8x128xi32>
    %11 = vector.broadcast %8 : vector<1x128xf32> to vector<8x128xf32>
    %12 = arith.cmpf oeq, %5, %11 : vector<8x128xf32>
    %c8_i32 = arith.constant 8 : i32
    %13 = vector.broadcast %c8_i32 : i32 to vector<8x128xi32>
    %14 = arith.select %12, %10, %13 : vector<8x128xi1>, vector<8x128xi32>
    %cst_10 = arith.constant dense<2147483647> : vector<128xi32>
    %15 = vector.multi_reduction <minsi>, %14, %cst_10 [0] : vector<8x128xi32> to vector<128xi32>
    %16 = vector.shape_cast %15 : vector<128xi32> to vector<1x128xi32>
    %c6_i32 = arith.constant 6 : i32
    %17 = vector.broadcast %c6_i32 : i32 to vector<1x128xi32>
    %18 = arith.cmpi sge, %16, %17 : vector<1x128xi32>
    %c0_i32 = arith.constant 0 : i32
    %19 = vector.broadcast %c0_i32 : i32 to vector<1x128xi32>
    %20 = arith.select %18, %19, %16 : vector<1x128xi1>, vector<1x128xi32>
    %c0_11 = arith.constant 0 : index
    %c0_12 = arith.constant 0 : index
    %21 = vector.load %arg6[%c0_11, %c0_12] : memref<1x128xi32, #tpu.memory_space<vmem>>, vector<1x128xi32>
    tpu.vector_store %arg6[%c0_11, %c0_12], %20 {strides = array<i32>} : memref<1x128xi32, #tpu.memory_space<vmem>>, vector<1x128xi32>,
    return
  }
  func.func @transform_0(%arg0: i32) -> (i32, i32) {
    %c0_i32 = arith.constant 0 : i32
    %c0_i32_0 = arith.constant 0 : i32
    return %c0_i32, %arg0 : i32, i32
  }
  func.func @transform_1(%arg0: i32) -> (i32, i32) {
    %c0_i32 = arith.constant 0 : i32
    %c0_i32_0 = arith.constant 0 : i32
    %c0_i32_1 = arith.constant 0 : i32
    return %c0_i32, %c0_i32_0 : i32, i32
  }
  func.func @transform_2(%arg0: i32) -> (i32, i32) {
    %c0_i32 = arith.constant 0 : i32
    %c0_i32_0 = arith.constant 0 : i32
    %c0_i32_1 = arith.constant 0 : i32
    return %c0_i32, %c0_i32_0 : i32, i32
  }
  func.func @transform_3(%arg0: i32) -> (i32, i32) {
    %c0_i32 = arith.constant 0 : i32
    %c0_i32_0 = arith.constant 0 : i32
    return %c0_i32, %arg0 : i32, i32
  }
  func.func @transform_4(%arg0: i32) -> (i32, i32) {
    %c0_i32 = arith.constant 0 : i32
    %c0_i32_0 = arith.constant 0 : i32
    return %c0_i32, %arg0 : i32, i32
  }
  func.func @transform_5(%arg0: i32) -> (i32, i32) {
    %c0_i32 = arith.constant 0 : i32
    %c0_i32_0 = arith.constant 0 : i32
    return %c0_i32, %arg0 : i32, i32
  }
}

</mosaic_0001>

<llo_original>
// kernel: dir_link_labeler_pallas.1
$region0: #{dir_link_labeler_pallas.1}
  #allocation0 [shape = 'u32[]', space=smem, size = 0x4, offset = 0x4, fixed_abs, tag = 'smem constant byte address 0x4 - core index']
  #allocation1 [shape = 'u32[144,128]{1,0:T(1,128)}', space=vmem, size = 0x12000, scoped, tag = 'internal scratch']
  %s0 = inlined_call_operand.vmem [shape: bf16[32,128], index: 0, kind: input, shape index: {}]
  %s1 = inlined_call_operand.vmem [shape: bf16[8,32], index: 1, kind: input, shape index: {}]
  %s2 = inlined_call_operand.vmem [shape: f32[8,1], index: 2, kind: input, shape index: {}]
  %s3 = inlined_call_operand.vmem [shape: f32[8,128], index: 3, kind: output, shape index: {0}]
  %s4 = inlined_call_operand.vmem [shape: f32[1,128], index: 4, kind: output, shape index: {1}]
  %s5 = inlined_call_operand.vmem [shape: s32[1,128], index: 5, kind: output, shape index: {2}]
  %6 = xla_tuple %s3, %s4, %s5
  %s7 = sld [smem:[#allocation0]]
  $region38: #{dir_link_labeler_pallas.1} parent=0
    _
  %s9 = ssub.s32 1, %s7
  %s10 = scalar_select 0, %s9, %s7
  // Predicated region
  $region2: #{dir_link_labeler_pallas.1} parent=0 // pred_check
    _
  $region3: #{dir_link_labeler_pallas.1} parent=0 // pred_check_branch
    %12 = sbr.rel (0) target = $region5
  $region4: #{dir_link_labeler_pallas.1} parent=0 // pred_region
    _
  $region5: #{dir_link_labeler_pallas.1} parent=0 // pred_fallthru
    _
  // Predicated region
  $region6: #{dir_link_labeler_pallas.1} parent=0 // pred_check
    _
  $region7: #{dir_link_labeler_pallas.1} parent=0 // pred_check_branch
    %14 = sbr.rel (0) target = $region9
  $region8: #{dir_link_labeler_pallas.1} parent=0 // pred_region
    _
  $region9: #{dir_link_labeler_pallas.1} parent=0 // pred_fallthru
    _
  // Predicated region
  $region10: #{dir_link_labeler_pallas.1} parent=0 // pred_check
    _
  $region11: #{dir_link_labeler_pallas.1} parent=0 // pred_check_branch
    %16 = sbr.rel (0) target = $region13
  $region12: #{dir_link_labeler_pallas.1} parent=0 // pred_region
    _
  $region13: #{dir_link_labeler_pallas.1} parent=0 // pred_fallthru
    _
  %v18 = vld [vmem:[%s0] sm:$0xf]
  %v19 = vld [vmem:[%s0 + $0x4] sm:$0xf]
  %v20 = vld [vmem:[%s0 + $0x8] sm:$0xf]
  %v21 = vld [vmem:[%s0 + $0xc] sm:$0xf]
  %v22 = vld [vmem:[%s1] sm:$0xf]
  %v23 = vld [vmem:[%s2] sm:$0xff]
  %25 = vset.pattern.permute.xlu0 0
  %26 = vperm.xlu0 %25, %v23
  %v27 = vpop.permute.xlu0 %26
  %v33 = vunpack.c.l.b16 %v18
  %v34 = vunpack.c.l.b16 %v19
  %v35 = vunpack.c.l.b16 %v20
  %v36 = vunpack.c.l.b16 %v21
  %v37 = vpack.c.b16 %v34, %v33
  %v38 = vpack.c.b16 %v36, %v35
  %vm41 = vcmask 261120
  %v43 = vsel %vm41, %v22, 0
  %45 = vmatprep.subr.bf16.mxu0 0
  %46 = vmatpush1.bf16.msra.mxu0 0
  %47 = vmatprep.subr.bf16.mxu0 0
  %48 = vmatpush1.bf16.msra.mxu0 0
  %49 = vmatprep.subr.bf16.mxu0 0
  %50 = vmatpush1.bf16.msra.mxu0 0
  %51 = vmatprep.subr.bf16.mxu0 0
  %52 = vmatpush1.bf16.msra.mxu0 0
  %53 = vmatprep.subr.bf16.mxu0 0
  %54 = vmatpush1.bf16.msra.mxu0 0
  %55 = vmatprep.subr.bf16.mxu0 0
  %56 = vmatpush1.bf16.msra.mxu0 0
  %57 = vmatprep.subr.bf16.mxu0 0
  %58 = vmatpush1.bf16.msra.mxu0 %v38
  %59 = vmatprep.subr.bf16.mxu0 0
  %60 = vmatpush1.bf16.msra.mxu0 %v37
  %61 = vmatprep.subr.bf16.mxu0 0
  %62 = vmatpush2.bf16.msra.mxu0 0
  %63 = vmatprep.subr.bf16.mxu0 0
  %64 = vmatpush2.bf16.msra.mxu0 0
  %65 = vmatprep.subr.bf16.mxu0 0
  %66 = vmatpush2.bf16.msra.mxu0 0
  %67 = vmatprep.subr.bf16.mxu0 0
  %68 = vmatpush2.bf16.msra.mxu0 0
  %69 = vmatprep.subr.bf16.mxu0 0
  %70 = vmatpush2.bf16.msra.mxu0 0
  %71 = vmatprep.subr.bf16.mxu0 0
  %72 = vmatpush2.bf16.msra.mxu0 0
  %73 = vmatprep.subr.bf16.mxu0 0
  %74 = vmatpush2.bf16.msra.mxu0 0
  %75 = vmatprep.subr.bf16.mxu0 0
  %76 = vmatpush2.bf16.msra.mxu0 0
  %77 = vmatprep.mubr.bf16.mxu0 0
  %78 = vmatmul.mubr.bf16.gmra.mxu0 %v43
  %v79 = vpop.f32.mrf.mxu0
  %v80 = vadd.f32 %v27, %v79
  %v81 = vpop.f32.mrf.mxu0
  %v82 = vpop.f32.mrf.mxu0
  %v83 = vpop.f32.mrf.mxu0
  %84 = vdwg.mxu0
  %85 = vst [vmem:[%s3] sm:$0xff] %v80
  %v86 = vrot.slane %v80, 4
  %v87 = vmax.f32 %v80, %v86
  %v88 = vrot.slane %v87, 2
  %v89 = vmax.f32 %v87, %v88
  %v90 = vrot.slane %v89, 1
  %v91 = vmax.f32 %v89, %v90
  %92 = vst [vmem:[%s4] sm:$0x1] %v91
  %v93 = vlaneseq
  %v94 = vshrl.u32 %v93, 7
  %vm95 = vcmp.eq.f32.partialorder %v80, %v91
  %v96 = vsel %vm95, %v94, 8
  %v97 = vrot.slane %v96, 4
  %vm98 = vcmp.lt.s32.totalorder %v96, %v97
  %v99 = vsel %vm98, %v96, %v97
  %v100 = vrot.slane %v99, 2
  %vm101 = vcmp.lt.s32.totalorder %v99, %v100
  %v102 = vsel %vm101, %v99, %v100
  %v103 = vrot.slane %v102, 1
  %vm104 = vcmp.lt.s32.totalorder %v102, %v103
  %v105 = vsel %vm104, %v102, %v103
  %vm106 = vcmp.ge.s32.totalorder %v105, 6
  %v107 = vsel %vm106, 0, %v105
  %108 = vst [vmem:[%s5] sm:$0x1] %v107
  // Predicated region
  $region14: #{dir_link_labeler_pallas.1} parent=0 // pred_check
    _
  $region15: #{dir_link_labeler_pallas.1} parent=0 // pred_check_branch
    %110 = sbr.rel (0) target = $region17
  $region16: #{dir_link_labeler_pallas.1} parent=0 // pred_region
    _
  $region17: #{dir_link_labeler_pallas.1} parent=0 // pred_fallthru
    _
  // Predicated region
  $region18: #{dir_link_labeler_pallas.1} parent=0 // pred_check
    _
  $region19: #{dir_link_labeler_pallas.1} parent=0 // pred_check_branch
    %112 = sbr.rel (0) target = $region21
  $region20: #{dir_link_labeler_pallas.1} parent=0 // pred_region
    _
  $region21: #{dir_link_labeler_pallas.1} parent=0 // pred_fallthru
    _
  // Predicated region
  $region22: #{dir_link_labeler_pallas.1} parent=0 // pred_check
    _
  $region23: #{dir_link_labeler_pallas.1} parent=0 // pred_check_branch
    %114 = sbr.rel (0) target = $region25
  $region24: #{dir_link_labeler_pallas.1} parent=0 // pred_region
    _
  $region25: #{dir_link_labeler_pallas.1} parent=0 // pred_fallthru
    _
  // Predicated region
  $region26: #{dir_link_labeler_pallas.1} parent=0 // pred_check
    _
  $region27: #{dir_link_labeler_pallas.1} parent=0 // pred_check_branch
    %116 = sbr.rel (0) target = $region29
  $region28: #{dir_link_labeler_pallas.1} parent=0 // pred_region
    _
  $region29: #{dir_link_labeler_pallas.1} parent=0 // pred_fallthru
    _
  // Predicated region
  $region30: #{dir_link_labeler_pallas.1} parent=0 // pred_check
    _
  $region31: #{dir_link_labeler_pallas.1} parent=0 // pred_check_branch
    %118 = sbr.rel (0) target = $region33
  $region32: #{dir_link_labeler_pallas.1} parent=0 // pred_region
    _
  $region33: #{dir_link_labeler_pallas.1} parent=0 // pred_fallthru
    _
  // Predicated region
  $region34: #{dir_link_labeler_pallas.1} parent=0 // pred_check
    _
  $region35: #{dir_link_labeler_pallas.1} parent=0 // pred_check_branch
    %120 = sbr.rel (0) target = $region37
  $region36: #{dir_link_labeler_pallas.1} parent=0 // pred_region
    _
  $region37: #{dir_link_labeler_pallas.1} parent=0 // pred_fallthru
    _

</llo_original>
